<compile_context>
chip_gen: v6e
topology: v6e:2x2x1
jax: 0.10.0
libtpu: 0.0.40
codegen_flags: <defaults>
</compile_context>

<pallas_src>
from functools import partial

import jax
import jax.numpy as jnp
from jax import lax
from jax.experimental import pallas as pl
from jax.experimental.pallas import tpu as pltpu

EPS = 1e-5
_FUSED_BYTES_BUDGET = 2 << 20          # x + y(f32) + out bytes for the fused path
_VMEM_LIMIT = 32 * 1024 * 1024         # safe on v5e/v6e/v7x; raises v5e default


# --------------------------------------------------------------------------- #
# Fused single-call path (small N*L): linear + BN(batch stats) + ReLU in one.
# --------------------------------------------------------------------------- #
def _fused_kernel(w_ref, g_ref, b_ref, x_ref, o_ref):
    # w_ref: (Cout, Cin); g_ref/b_ref: (Cout, 1); x_ref: (N, Cin, L);
    # o_ref: (N, Cout, L).  Everything resident in VMEM.
    n_tot, cin, l_tot = x_ref.shape
    inv_m = 1.0 / float(n_tot * l_tot)

    w = w_ref[...]
    x = x_ref[...]

    # y[n,o,l] = sum_c w[o,c] * x[n,c,l] -- VPU contraction over the (small)
    # Cin axis; trace size independent of N, no per-n MXU push/pop.
    y = None
    for c in range(cin):
        term = w[:, c:c + 1][None] * x[:, c:c + 1, :]     # (N, Cout, L)
        y = term if y is None else y + term

    # BatchNorm batch statistics over (N, L), centered (numerically safe).
    mean = jnp.sum(jnp.sum(y, axis=2, keepdims=True), axis=0, keepdims=True) * inv_m
    cent = y - mean
    var = jnp.sum(jnp.sum(cent * cent, axis=2, keepdims=True), axis=0, keepdims=True) * inv_m

    scale = g_ref[...][None] * lax.rsqrt(var + EPS)       # (1, Cout, 1)
    shift = b_ref[...][None] - mean * scale               # (1, Cout, 1)
    o_ref[...] = jnp.maximum(y * scale + shift, 0.0).astype(o_ref.dtype)


def _fused_call(x, weight, g2, b2):
    N, Cin, L = x.shape
    Cout = weight.shape[0]
    return pl.pallas_call(
        _fused_kernel,
        out_shape=jax.ShapeDtypeStruct((N, Cout, L), x.dtype),
        grid_spec=pltpu.PrefetchScalarGridSpec(
            num_scalar_prefetch=0,
            grid=(1,),
            in_specs=[
                pl.BlockSpec((Cout, Cin), lambda i: (0, 0)),
                pl.BlockSpec((Cout, 1), lambda i: (0, 0)),
                pl.BlockSpec((Cout, 1), lambda i: (0, 0)),
                pl.BlockSpec((N, Cin, L), lambda i: (0, 0, 0)),
            ],
            out_specs=pl.BlockSpec((N, Cout, L), lambda i: (0, 0, 0)),
        ),
        compiler_params=pltpu.CompilerParams(
            dimension_semantics=("arbitrary",),
            vmem_limit_bytes=_VMEM_LIMIT),
    )(weight, g2, b2, x)


# --------------------------------------------------------------------------- #
# Tiled two-pass path (large N*L).
# --------------------------------------------------------------------------- #
def _xstats_kernel(x_ref, sumx_ref, gram_ref):
    # x_ref: (NB, Cin, L_TILE); sumx_ref: (Cin, 1); gram_ref: (Cin, Cin).
    # Per-N-block partials, accumulated across the L-tile ("arbitrary") axis.
    @pl.when(pl.program_id(1) == 0)
    def _():
        sumx_ref[...] = jnp.zeros_like(sumx_ref)
        gram_ref[...] = jnp.zeros_like(gram_ref)

    x = x_ref[...]
    sumx_ref[...] += jnp.sum(jnp.sum(x, axis=2, keepdims=True), axis=0)
    # Gram contribution: batched (over NB) K=L_TILE contraction on the MXU.
    g = lax.dot_general(x, x, (((2,), (2,)), ((0,), (0,))),
                        preferred_element_type=jnp.float32)      # (NB, Cin, Cin)
    gram_ref[...] += jnp.sum(g, axis=0)


def _apply_kernel(w_ref, g_ref, b_ref, sumx_ref, gram_ref, x_ref, o_ref, *, inv_m):
    # BN fold entirely in-kernel (tiny: ~Cout*Cin muls + Cout rsqrt per step).
    w = w_ref[...]                                               # (Cout, Cin)
    sum_x = jnp.sum(sumx_ref[...], axis=0)                       # (Cin, 1)
    gram = jnp.sum(gram_ref[...], axis=0)                        # (Cin, Cin)

    mean = jnp.dot(w, sum_x, preferred_element_type=jnp.float32) * inv_m   # (Cout, 1)
    wg = jnp.dot(w, gram, preferred_element_type=jnp.float32)              # (Cout, Cin)
    sumsq = jnp.sum(wg * w, axis=1, keepdims=True)                         # (Cout, 1)
    var = jnp.maximum(sumsq * inv_m - mean * mean, 0.0)                    # biased var

    scale = g_ref[...] * lax.rsqrt(var + EPS)                    # (Cout, 1)
    shift = b_ref[...] - mean * scale                            # (Cout, 1)
    w_s = w * scale                                              # (Cout, Cin)

    nb = x_ref.shape[0]
    for n in range(nb):
        y = jnp.dot(w_s, x_ref[n], preferred_element_type=jnp.float32)  # (Cout, L_TILE)
        o_ref[n] = jnp.maximum(y + shift, 0.0).astype(o_ref.dtype)


def _choose_tiles(N, Cin, Cout, L, target_bytes=2 << 20, max_l_tile=32768, max_nb=16):
    """Pick (NB, L_TILE) targeting >= ~target_bytes of in+out traffic per step."""
    if L % 128 == 0:
        lt = 128
        while lt * 2 <= max_l_tile and L % (lt * 2) == 0:
            lt *= 2
    else:
        lt = L                                # full extent (allowed by Pallas)
    per_n = (Cin + Cout) * 4 * lt
    nb = 1
    while (nb * 2 <= min(N, max_nb)) and (N % (nb * 2) == 0) and (nb * per_n < target_bytes):
        nb *= 2
    return nb, lt


def _tiled_call(x, weight, g2, b2, *, l_tile=None, n_block=None):
    N, Cin, L = x.shape
    Cout = weight.shape[0]
    nb_auto, lt_auto = _choose_tiles(N, Cin, Cout, L)
    NB = n_block if n_block is not None else nb_auto
    LT = l_tile if l_tile is not None else lt_auto
    assert N % NB == 0 and L % LT == 0, "tile overrides must divide the array"
    num_nb, num_lt = N // NB, L // LT
    grid = (num_nb, num_lt)

    # --- pass 1: per-N-block x statistics (sum_x, Gram), no W@x, no y*y ------
    sumx_p, gram_p = pl.pallas_call(
        _xstats_kernel,
        out_shape=(jax.ShapeDtypeStruct((num_nb, Cin, 1), jnp.float32),
                   jax.ShapeDtypeStruct((num_nb, Cin, Cin), jnp.float32)),
        grid_spec=pltpu.PrefetchScalarGridSpec(
            num_scalar_prefetch=0,
            grid=grid,
            in_specs=[pl.BlockSpec((NB, Cin, LT), lambda nb, lt: (nb, 0, lt))],
            out_specs=(pl.BlockSpec((None, Cin, 1), lambda nb, lt: (nb, 0, 0)),
                       pl.BlockSpec((None, Cin, Cin), lambda nb, lt: (nb, 0, 0))),
        ),
        compiler_params=pltpu.CompilerParams(
            dimension_semantics=("parallel", "arbitrary"),
            vmem_limit_bytes=_VMEM_LIMIT),
    )(x)

    # --- pass 2: fold BN in-kernel, out = ReLU((scale*W)@x + shift) ----------
    kern = partial(_apply_kernel, inv_m=1.0 / float(N * L))
    out = pl.pallas_call(
        kern,
        out_shape=jax.ShapeDtypeStruct((N, Cout, L), x.dtype),
        grid_spec=pltpu.PrefetchScalarGridSpec(
            num_scalar_prefetch=0,
            grid=grid,
            in_specs=[
                pl.BlockSpec((Cout, Cin), lambda nb, lt: (0, 0)),        # pinned W
                pl.BlockSpec((Cout, 1), lambda nb, lt: (0, 0)),          # pinned gamma
                pl.BlockSpec((Cout, 1), lambda nb, lt: (0, 0)),          # pinned beta
                pl.BlockSpec((num_nb, Cin, 1), lambda nb, lt: (0, 0, 0)),   # partials
                pl.BlockSpec((num_nb, Cin, Cin), lambda nb, lt: (0, 0, 0)),
                pl.BlockSpec((NB, Cin, LT), lambda nb, lt: (nb, 0, lt)),
            ],
            out_specs=pl.BlockSpec((NB, Cout, LT), lambda nb, lt: (nb, 0, lt)),
        ),
        compiler_params=pltpu.CompilerParams(
            dimension_semantics=("parallel", "parallel"),
            vmem_limit_bytes=_VMEM_LIMIT),
    )(weight, g2, b2, sumx_p, gram_p, x)
    return out


# --------------------------------------------------------------------------- #
# Public wrapper
# --------------------------------------------------------------------------- #
def linear_norm_activation(x, weight, gamma, beta, *, force_tiled=False,
                           l_tile=None, n_block=None):
    """x: (N, Cin, L); weight: (Cout, Cin); gamma/beta: (Cout,) -> (N, Cout, L)."""
    N, Cin, L = x.shape
    Cout = weight.shape[0]
    g2 = gamma.reshape(Cout, 1).astype(jnp.float32)
    b2 = beta.reshape(Cout, 1).astype(jnp.float32)

    fused_bytes = N * L * (Cin + 2 * Cout) * 4      # x + y(f32) + out
    if (not force_tiled) and fused_bytes <= _FUSED_BYTES_BUDGET:
        return _fused_call(x, weight, g2, b2)
    return _tiled_call(x, weight, g2, b2, l_tile=l_tile, n_block=n_block)


def _reference(x_ncl, weight, gamma, beta):
    # Pure-JAX reference for validation.
    y = jnp.einsum("ncl,oc->nol", x_ncl, weight)                # (N, Cout, L)
    mean = jnp.mean(y, axis=(0, 2), keepdims=True)
    var = jnp.mean((y - mean) ** 2, axis=(0, 2), keepdims=True)
    y_hat = (y - mean) / jnp.sqrt(var + EPS)
    out = y_hat * gamma[None, :, None] + beta[None, :, None]
    return jnp.maximum(out, 0.0)


if __name__ == "__main__":
    key = jax.random.PRNGKey(0)
    kx, kw, kg, kb, kx2 = jax.random.split(key, 5)

    # --- test 1: real module-scale shapes -> fused single-call path ----------
    N, Cin, Cout, L = 2, 4, 8, 16
    x = jax.random.normal(kx, (N, Cin, L), dtype=jnp.float32)

    # nn.Linear default init: U(-1/sqrt(in_size), 1/sqrt(in_size)), no bias.
    bound = 1.0 / (Cin ** 0.5)
    weight = jax.random.uniform(kw, (Cout, Cin), minval=-bound, maxval=bound,
                                dtype=jnp.float32)
    gamma = 1.0 + 0.1 * jax.random.normal(kg, (Cout,), dtype=jnp.float32)
    beta = 0.1 * jax.random.normal(kb, (Cout,), dtype=jnp.float32)

    fused_fn = jax.jit(linear_norm_activation)
    out = jax.block_until_ready(fused_fn(x, weight, gamma, beta))
    ref = _reference(x, weight, gamma, beta)
    assert out.shape == (N, Cout, L)
    assert jnp.allclose(out, ref, atol=1e-4, rtol=1e-4), "fused path mismatch"

    # --- test 2: exercise the tiled two-pass path (multi-N-block, multi-L-tile)
    N2, L2 = 4, 1024
    x2 = jax.random.normal(kx2, (N2, Cin, L2), dtype=jnp.float32)
    tiled_fn = jax.jit(lambda a, w, g, b: linear_norm_activation(
        a, w, g, b, force_tiled=True, l_tile=256, n_block=2))
    out2 = jax.block_until_ready(tiled_fn(x2, weight, gamma, beta))
    ref2 = _reference(x2, weight, gamma, beta)
    assert out2.shape == (N2, Cout, L2)
    assert jnp.allclose(out2, ref2, atol=2e-3, rtol=2e-3), "tiled path mismatch"

    print("KERNEL_OK")
</pallas_src>

<mosaic_0001>
module attributes {stable_mosaic.version = 11 : i64} {
  func.func @_fused_kernel(%arg0: i32, %arg1: memref<8x4xf32, #tpu.memory_space<vmem>>, %arg2: memref<8x1xf32, #tpu.memory_space<vmem>>, %arg3: memref<8x1xf32, #tpu.memory_space<vmem>>, %arg4: memref<2x4x16xf32, #tpu.memory_space<vmem>>, %arg5: memref<2x8x16xf32, #tpu.memory_space<vmem>>) attributes {dimension_semantics = [#tpu.dimension_semantics<arbitrary>], iteration_bounds = array<i64: 1>, scalar_prefetch = 0 : i64, scratch_operands = 0 : i64, tpu.core_type = #tpu.core_type<tc>, window_params = [{pipeline_mode = #tpu.pipeline_mode<synchronous>, transform_indices = @transform_0, window_bounds = array<i64: 8, 4>}, {pipeline_mode = #tpu.pipeline_mode<synchronous>, transform_indices = @transform_1, window_bounds = array<i64: 8, 1>}, {pipeline_mode = #tpu.pipeline_mode<synchronous>, transform_indices = @transform_2, window_bounds = array<i64: 8, 1>}, {pipeline_mode = #tpu.pipeline_mode<synchronous>, transform_indices = @transform_3, window_bounds = array<i64: 2, 4, 16>}, {pipeline_mode = #tpu.pipeline_mode<synchronous>, transform_indices = @transform_4, window_bounds = array<i64: 2, 8, 16>}]} {
    %c0 = arith.constant 0 : index
    %c0_0 = arith.constant 0 : index
    %0 = vector.load %arg1[%c0, %c0_0] : memref<8x4xf32, #tpu.memory_space<vmem>>, vector<8x4xf32>
    %c0_1 = arith.constant 0 : index
    %c0_2 = arith.constant 0 : index
    %c0_3 = arith.constant 0 : index
    %1 = vector.load %arg4[%c0_1, %c0_2, %c0_3] : memref<2x4x16xf32, #tpu.memory_space<vmem>>, vector<2x4x16xf32>
    %2 = vector.extract_strided_slice %0 {offsets = [0, 0], sizes = [8, 1], strides = [1, 1]} : vector<8x4xf32> to vector<8x1xf32>
    %3 = vector.shape_cast %2 : vector<8x1xf32> to vector<1x8x1xf32>
    %4 = vector.extract_strided_slice %1 {offsets = [0, 0, 0], sizes = [2, 1, 16], strides = [1, 1, 1]} : vector<2x4x16xf32> to vector<2x1x16xf32>
    %5 = vector.broadcast %3 : vector<1x8x1xf32> to vector<2x8x16xf32>
    %6 = vector.broadcast %4 : vector<2x1x16xf32> to vector<2x8x16xf32>
    %7 = arith.mulf %5, %6 : vector<2x8x16xf32>
    %8 = vector.extract_strided_slice %0 {offsets = [0, 1], sizes = [8, 1], strides = [1, 1]} : vector<8x4xf32> to vector<8x1xf32>
    %9 = vector.shape_cast %8 : vector<8x1xf32> to vector<1x8x1xf32>
    %10 = vector.extract_strided_slice %1 {offsets = [0, 1, 0], sizes = [2, 1, 16], strides = [1, 1, 1]} : vector<2x4x16xf32> to vector<2x1x16xf32>
    %11 = vector.broadcast %9 : vector<1x8x1xf32> to vector<2x8x16xf32>
    %12 = vector.broadcast %10 : vector<2x1x16xf32> to vector<2x8x16xf32>
    %13 = arith.mulf %11, %12 : vector<2x8x16xf32>
    %14 = arith.addf %7, %13 : vector<2x8x16xf32>
    %15 = vector.extract_strided_slice %0 {offsets = [0, 2], sizes = [8, 1], strides = [1, 1]} : vector<8x4xf32> to vector<8x1xf32>
    %16 = vector.shape_cast %15 : vector<8x1xf32> to vector<1x8x1xf32>
    %17 = vector.extract_strided_slice %1 {offsets = [0, 2, 0], sizes = [2, 1, 16], strides = [1, 1, 1]} : vector<2x4x16xf32> to vector<2x1x16xf32>
    %18 = vector.broadcast %16 : vector<1x8x1xf32> to vector<2x8x16xf32>
    %19 = vector.broadcast %17 : vector<2x1x16xf32> to vector<2x8x16xf32>
    %20 = arith.mulf %18, %19 : vector<2x8x16xf32>
    %21 = arith.addf %14, %20 : vector<2x8x16xf32>
    %22 = vector.extract_strided_slice %0 {offsets = [0, 3], sizes = [8, 1], strides = [1, 1]} : vector<8x4xf32> to vector<8x1xf32>
    %23 = vector.shape_cast %22 : vector<8x1xf32> to vector<1x8x1xf32>
    %24 = vector.extract_strided_slice %1 {offsets = [0, 3, 0], sizes = [2, 1, 16], strides = [1, 1, 1]} : vector<2x4x16xf32> to vector<2x1x16xf32>
    %25 = vector.broadcast %23 : vector<1x8x1xf32> to vector<2x8x16xf32>
    %26 = vector.broadcast %24 : vector<2x1x16xf32> to vector<2x8x16xf32>
    %27 = arith.mulf %25, %26 : vector<2x8x16xf32>
    %28 = arith.addf %21, %27 : vector<2x8x16xf32>
    %cst = arith.constant dense<0.000000e+00> : vector<2x8xf32>
    %29 = vector.multi_reduction <add>, %28, %cst [2] : vector<2x8x16xf32> to vector<2x8xf32>
    %30 = vector.shape_cast %29 : vector<2x8xf32> to vector<2x8x1xf32>
    %cst_4 = arith.constant dense<0.000000e+00> : vector<8x1xf32>
    %31 = vector.multi_reduction <add>, %30, %cst_4 [0] : vector<2x8x1xf32> to vector<8x1xf32>
    %32 = vector.shape_cast %31 : vector<8x1xf32> to vector<1x8x1xf32>
    %cst_5 = arith.constant 3.125000e-02 : f32
    %33 = vector.broadcast %cst_5 : f32 to vector<1x8x1xf32>
    %34 = arith.mulf %32, %33 : vector<1x8x1xf32>
    %35 = vector.broadcast %34 : vector<1x8x1xf32> to vector<2x8x16xf32>
    %36 = arith.subf %28, %35 : vector<2x8x16xf32>
    %37 = arith.mulf %36, %36 : vector<2x8x16xf32>
    %cst_6 = arith.constant dense<0.000000e+00> : vector<2x8xf32>
    %38 = vector.multi_reduction <add>, %37, %cst_6 [2] : vector<2x8x16xf32> to vector<2x8xf32>
    %39 = vector.shape_cast %38 : vector<2x8xf32> to vector<2x8x1xf32>
    %cst_7 = arith.constant dense<0.000000e+00> : vector<8x1xf32>
    %40 = vector.multi_reduction <add>, %39, %cst_7 [0] : vector<2x8x1xf32> to vector<8x1xf32>
    %41 = vector.shape_cast %40 : vector<8x1xf32> to vector<1x8x1xf32>
    %cst_8 = arith.constant 3.125000e-02 : f32
    %42 = vector.broadcast %cst_8 : f32 to vector<1x8x1xf32>
    %43 = arith.mulf %41, %42 : vector<1x8x1xf32>
    %c0_9 = arith.constant 0 : index
    %c0_10 = arith.constant 0 : index
    %44 = vector.load %arg2[%c0_9, %c0_10] : memref<8x1xf32, #tpu.memory_space<vmem>>, vector<8x1xf32>
    %45 = vector.shape_cast %44 : vector<8x1xf32> to vector<1x8x1xf32>
    %cst_11 = arith.constant 9.99999974E-6 : f32
    %46 = vector.broadcast %cst_11 : f32 to vector<1x8x1xf32>
    %47 = arith.addf %43, %46 : vector<1x8x1xf32>
    %48 = math.rsqrt %47 : vector<1x8x1xf32>
    %49 = arith.mulf %45, %48 : vector<1x8x1xf32>
    %c0_12 = arith.constant 0 : index
    %c0_13 = arith.constant 0 : index
    %50 = vector.load %arg3[%c0_12, %c0_13] : memref<8x1xf32, #tpu.memory_space<vmem>>, vector<8x1xf32>
    %51 = vector.shape_cast %50 : vector<8x1xf32> to vector<1x8x1xf32>
    %52 = arith.mulf %34, %49 : vector<1x8x1xf32>
    %53 = arith.subf %51, %52 : vector<1x8x1xf32>
    %54 = vector.broadcast %49 : vector<1x8x1xf32> to vector<2x8x16xf32>
    %55 = arith.mulf %28, %54 : vector<2x8x16xf32>
    %56 = vector.broadcast %53 : vector<1x8x1xf32> to vector<2x8x16xf32>
    %57 = arith.addf %55, %56 : vector<2x8x16xf32>
    %cst_14 = arith.constant 0.000000e+00 : f32
    %58 = vector.broadcast %cst_14 : f32 to vector<2x8x16xf32>
    %59 = arith.maximumf %57, %58 : vector<2x8x16xf32>
    %c0_15 = arith.constant 0 : index
    %c0_16 = arith.constant 0 : index
    %c0_17 = arith.constant 0 : index
    %60 = vector.load %arg5[%c0_15, %c0_16, %c0_17] : memref<2x8x16xf32, #tpu.memory_space<vmem>>, vector<2x8x16xf32>
    tpu.vector_store %arg5[%c0_15, %c0_16, %c0_17], %59 {strides = array<i32>} : memref<2x8x16xf32, #tpu.memory_space<vmem>>, vector<2x8x16xf32>,
    return
  }
  func.func @transform_0(%arg0: i32) -> (i32, i32) {
    %c0_i32 = arith.constant 0 : i32
    %c0_i32_0 = arith.constant 0 : i32
    %c0_i32_1 = arith.constant 0 : i32
    return %c0_i32, %c0_i32_0 : i32, i32
  }
  func.func @transform_1(%arg0: i32) -> (i32, i32) {
    %c0_i32 = arith.constant 0 : i32
    %c0_i32_0 = arith.constant 0 : i32
    %c0_i32_1 = arith.constant 0 : i32
    return %c0_i32, %c0_i32_0 : i32, i32
  }
  func.func @transform_2(%arg0: i32) -> (i32, i32) {
    %c0_i32 = arith.constant 0 : i32
    %c0_i32_0 = arith.constant 0 : i32
    %c0_i32_1 = arith.constant 0 : i32
    return %c0_i32, %c0_i32_0 : i32, i32
  }
  func.func @transform_3(%arg0: i32) -> (i32, i32, i32) {
    %c0_i32 = arith.constant 0 : i32
    %c0_i32_0 = arith.constant 0 : i32
    %c0_i32_1 = arith.constant 0 : i32
    %c0_i32_2 = arith.constant 0 : i32
    return %c0_i32, %c0_i32_0, %c0_i32_1 : i32, i32, i32
  }
  func.func @transform_4(%arg0: i32) -> (i32, i32, i32) {
    %c0_i32 = arith.constant 0 : i32
    %c0_i32_0 = arith.constant 0 : i32
    %c0_i32_1 = arith.constant 0 : i32
    %c0_i32_2 = arith.constant 0 : i32
    return %c0_i32, %c0_i32_0, %c0_i32_1 : i32, i32, i32
  }
}

</mosaic_0001>

<llo_original>
// kernel: linear_norm_activation.1
$region0: #{linear_norm_activation.1}
  #allocation0 [shape = 'u32[]', space=smem, size = 0x4, offset = 0x4, fixed_abs, tag = 'smem constant byte address 0x4 - core index']
  #allocation1 [shape = 'u32[144,128]{1,0:T(1,128)}', space=vmem, size = 0x12000, scoped, tag = 'internal scratch']
  %s0 = inlined_call_operand.vmem [shape: f32[8,4], index: 0, kind: input, shape index: {}]
  %s1 = inlined_call_operand.vmem [shape: f32[8,1], index: 1, kind: input, shape index: {}]
  %s2 = inlined_call_operand.vmem [shape: f32[8,1], index: 2, kind: input, shape index: {}]
  %s3 = inlined_call_operand.vmem [shape: f32[2,4,16], index: 3, kind: input, shape index: {}]
  %s4 = inlined_call_operand.hbm [shape: f32[2,8,16], index: 4, kind: output, shape index: {}]
  %s5 = sld [smem:[#allocation0]]
  $region26: #{linear_norm_activation.1} parent=0
    _
  %s7 = ssub.s32 1, %s5
  %s8 = scalar_select 0, %s7, %s5
  $region1: #{linear_norm_activation.1} parent=0
    #allocation2 [shape = 'u8[8192]{0}', space=vmem, size = 0x2000, scoped, tag = 'output window, operand 0, single buffered']
    #allocation3 [shape = 's32[1]{0}', space=sflag, size = 0x4, scoped, tag = 'scoped memory for linear_norm_activation.1']
    %9 = vsyncpa [#allocation3], 0
    // Predicated region
    $region2: #{linear_norm_activation.1} parent=1 // pred_check
      _
    $region3: #{linear_norm_activation.1} parent=1 // pred_check_branch
      %11 = sbr.rel (0) target = $region5
    $region4: #{linear_norm_activation.1} parent=1 // pred_region
      _
    $region5: #{linear_norm_activation.1} parent=1 // pred_fallthru
      _
    // Predicated region
    $region6: #{linear_norm_activation.1} parent=1 // pred_check
      _
    $region7: #{linear_norm_activation.1} parent=1 // pred_check_branch
      %13 = sbr.rel (0) target = $region9
    $region8: #{linear_norm_activation.1} parent=1 // pred_region
      _
    $region9: #{linear_norm_activation.1} parent=1 // pred_fallthru
      _
    // Predicated region
    $region10: #{linear_norm_activation.1} parent=1 // pred_check
      _
    $region11: #{linear_norm_activation.1} parent=1 // pred_check_branch
      %15 = sbr.rel (0) target = $region13
    $region12: #{linear_norm_activation.1} parent=1 // pred_region
      _
    $region13: #{linear_norm_activation.1} parent=1 // pred_fallthru
      _
    // Predicated region
    $region14: #{linear_norm_activation.1} parent=1 // pred_check
      _
    $region15: #{linear_norm_activation.1} parent=1 // pred_check_branch
      %17 = sbr.rel (0) target = $region17
    $region16: #{linear_norm_activation.1} parent=1 // pred_region
      _
    $region17: #{linear_norm_activation.1} parent=1 // pred_fallthru
      _
    %v18 = vld [vmem:[%s0] sm:$0xff]
    %v19 = vld [vmem:[%s3] sm:$0xf]
    %v20 = vld [vmem:[%s3 + $0x4] sm:$0xf]
    %22 = vset.pattern.permute.xlu0 0
    %23 = vperm.xlu0 %22, %v18
    %v24 = vpop.permute.xlu0 %23
    %v26 = vlaneseq
    %v27 = vshrl.u32 %v26, 7
    %v28 = vsub.s32 0, %v27
    %v29 = vrot.slane %v19, %v28
    %v30 = vlaneseq
    %v31 = vshrl.u32 %v30, 7
    %v32 = vsub.s32 0, %v31
    %v33 = vrot.slane %v20, %v32
    %v34 = vmul.f32 %v24, %v29
    %v35 = vmul.f32 %v24, %v33
    %36 = vset.pattern.permute.xlu0 1
    %37 = vperm.xlu0 %36, %v18
    %v38 = vpop.permute.xlu0 %37
    %v40 = vlaneseq
    %v41 = vshrl.u32 %v40, 7
    %v42 = vsub.s32 1, %v41
    %v43 = vrot.slane %v19, %v42
    %v44 = vlaneseq
    %v45 = vshrl.u32 %v44, 7
    %v46 = vsub.s32 1, %v45
    %v47 = vrot.slane %v20, %v46
    %v48 = vmul.f32 %v38, %v43
    %v49 = vmul.f32 %v38, %v47
    %v50 = vadd.f32 %v34, %v48
    %v51 = vadd.f32 %v35, %v49
    %52 = vset.pattern.permute.xlu0 2
    %53 = vperm.xlu0 %52, %v18
    %v54 = vpop.permute.xlu0 %53
    %v56 = vlaneseq
    %v57 = vshrl.u32 %v56, 7
    %v58 = vsub.s32 2, %v57
    %v59 = vrot.slane %v19, %v58
    %v60 = vlaneseq
    %v61 = vshrl.u32 %v60, 7
    %v62 = vsub.s32 2, %v61
    %v63 = vrot.slane %v20, %v62
    %v64 = vmul.f32 %v54, %v59
    %v65 = vmul.f32 %v54, %v63
    %v66 = vadd.f32 %v50, %v64
    %v67 = vadd.f32 %v51, %v65
    %68 = vset.pattern.permute.xlu0 3
    %69 = vperm.xlu0 %68, %v18
    %v70 = vpop.permute.xlu0 %69
    %v72 = vlaneseq
    %v73 = vshrl.u32 %v72, 7
    %v74 = vsub.s32 3, %v73
    %v75 = vrot.slane %v19, %v74
    %v76 = vlaneseq
    %v77 = vshrl.u32 %v76, 7
    %v78 = vsub.s32 3, %v77
    %v79 = vrot.slane %v20, %v78
    %v80 = vmul.f32 %v70, %v75
    %v81 = vmul.f32 %v70, %v79
    %v82 = vadd.f32 %v66, %v80
    %v83 = vadd.f32 %v67, %v81
    %vm84 = vcmask 130048
    %v85 = vsel %vm84, %v82, 0.0
    %86 = vadd.xlane.f32.xlu0 %v85
    %v87 = vpop.xlane.xlu0 %86
    %v88 = vsel %vm84, %v83, 0.0
    %89 = vadd.xlane.f32.xlu0 %v88
    %v90 = vpop.xlane.xlu0 %89
    %v91 = vadd.f32 %v87, %v90
    %v92 = vmul.f32 %v91, 0.03125
    %v93 = vsub.f32 %v82, %v92
    %v94 = vsub.f32 %v83, %v92
    %v95 = vmul.f32 %v93, %v93
    %v96 = vmul.f32 %v94, %v94
    %v97 = vsel %vm84, %v95, 0.0
    %98 = vadd.xlane.f32.xlu0 %v97
    %v99 = vpop.xlane.xlu0 %98
    %v100 = vsel %vm84, %v96, 0.0
    %101 = vadd.xlane.f32.xlu0 %v100
    %v102 = vpop.xlane.xlu0 %101
    %v103 = vadd.f32 %v99, %v102
    %v104 = vmul.f32 %v103, 0.03125
    %v105 = vld [vmem:[%s1] sm:$0xff]
    %v106 = vadd.f32 %v104, 1e-05
    %v107 = vrsqrt.pop %v106
    %v108 = vmul.f32 %v105, %v107
    %v109 = vld [vmem:[%s2] sm:$0xff]
    %v110 = vmul.f32 %v92, %v108
    %v111 = vsub.f32 %v109, %v110
    %113 = vset.pattern.permute.xlu0 0
    %114 = vperm.xlu0 %113, %v108
    %v115 = vpop.permute.xlu0 %114
    %v117 = vmul.f32 %v82, %v115
    %v118 = vmul.f32 %v83, %v115
    %120 = vset.pattern.permute.xlu0 0
    %121 = vperm.xlu0 %120, %v111
    %v122 = vpop.permute.xlu0 %121
    %v124 = vadd.f32 %v117, %v122
    %v125 = vadd.f32 %v118, %v122
    %v126 = vmax.f32 %v124, 0.0
    %v127 = vmax.f32 %v125, 0.0
    %128 = vst.msk [vmem:[#allocation2] sm:$0xff] %vm84, %v126
    %129 = vst.msk [vmem:[#allocation2 + $0x8] sm:$0xff] %vm84, %v127
    // Predicated region
    $region18: #{linear_norm_activation.1} parent=1 // pred_check
      _
    $region19: #{linear_norm_activation.1} parent=1 // pred_check_branch
      %131 = sbr.rel (0) target = $region21
    $region20: #{linear_norm_activation.1} parent=1 // pred_region
      %s133 = ssub.s32 256, 256
      %134 = vsyncadd [#allocation3], %s133
      %s135 = sshll.u32 [#allocation2], 4
      %s136 = int_to_ptr.vmem [resolvable:$true] %s135
      %141 = dma.vmem_to_hbm [thread:$0]  %s136, 256, %s4, [#allocation3], 128, 128, 8
    $region21: #{linear_norm_activation.1} parent=1 // pred_fallthru
      _
    // Predicated region
    $region22: #{linear_norm_activation.1} parent=1 // pred_check
      _
    $region23: #{linear_norm_activation.1} parent=1 // pred_check_branch
      %143 = sbr.rel (0) target = $region25
    $region24: #{linear_norm_activation.1} parent=1 // pred_region
      %144 = dma.done [#allocation3], 256
    $region25: #{linear_norm_activation.1} parent=1 // pred_fallthru
      _
    %145 = vsyncpa [#allocation3], 1

</llo_original>
